<compile_context>
chip_gen: v6e
topology: v6e:2x2x1
jax: 0.10.0
libtpu: 0.0.40
codegen_flags: <defaults>
</compile_context>

<pallas_src>
import math

import jax
import jax.numpy as jnp
import numpy as np
from jax.experimental import pallas as pl
from jax.experimental.pallas import tpu as pltpu


def _rope_kernel(q_ref, k_ref, cos_ref, sin_ref, qo_ref, ko_ref):
    # Block shapes: q/k/qo/ko -> (bb, ncb, Lw); cos/sin -> (bb, 1, Lw).
    cos = cos_ref[...]                      # varies with (batch, lane % D)
    sin = sin_ref[...]                      # pair-swap sign pre-folded in
    lw = q_ref.shape[-1]

    # Lane-parity mask; lane parity == head-dim parity because D is even and
    # every D-sized group starts at an even lane offset within the Lw chunk.
    even = (jax.lax.broadcasted_iota(jnp.int32, (1, 1, lw), 2) % 2) == 0

    for x_ref, o_ref in ((q_ref, qo_ref), (k_ref, ko_ref)):
        x = x_ref[...]                      # (bb, ncb, Lw), kept in input dtype
        # Even/odd pair swap via two XLU rolls + one VPU lane-parity select:
        #   swapped[..., 2i] = x[..., 2i+1], swapped[..., 2i+1] = x[..., 2i].
        # Wrapped elements are never selected (even lanes only read roll(+1),
        # odd lanes only read roll(-1), and Lw is even), so the chunked layout
        # stays exact.
        plus1 = pltpu.roll(x, shift=lw - 1, axis=2)   # value at p is x[p+1]
        minus1 = pltpu.roll(x, shift=1, axis=2)       # value at p is x[p-1]
        swapped = jnp.where(even, plus1, minus1)
        # The "-" on the even component lives in the pre-signed sin table;
        # cos/sin broadcast over the ncb (sublane-chunk) axis for free.
        o_ref[...] = (x * cos + swapped * sin).astype(o_ref.dtype)


def _lane_width(head_dim: int, merged: int) -> int:
    """Smallest multiple of head_dim that is also a multiple of 128 and divides
    the merged H*T*D extent; falls back to the full extent."""
    lw = head_dim * (128 // math.gcd(head_dim, 128))   # lcm(head_dim, 128)
    return lw if merged % lw == 0 else merged


def _build_tables(B, T, D, base, lane_width, dtype):
    """cos/sin rows matching RotaryEmbedding._build_cache: one D-periodic row
    per batch, pre-tiled only to the 128-aligned `lane_width` (NOT T*D)."""
    # TODO(synk): the torch module caches these across calls (seq_len_cached);
    # here they are recomputed per call (negligible, constant-folded under jit).
    inv_freq = 1.0 / (base ** (jnp.arange(0, D, 2, dtype=jnp.float32) / D))
    t = jnp.arange(T, dtype=jnp.float32)
    freqs = jnp.einsum("i,j->ij", t, inv_freq)        # (T, D/2)
    emb = jnp.concatenate((freqs, freqs), axis=-1)    # (T, D)
    # The torch broadcast binds the cache's leading (seq) axis to BATCH.
    cos = jnp.cos(emb)[:B]                            # (B, D)
    sin = jnp.sin(emb)[:B]
    # Fold the pair-swap sign into sin: x_rot[..., even] = -x[..., odd].
    sign = jnp.where(jnp.arange(D) % 2 == 0, -1.0, 1.0)
    sin = sin * sign
    reps = lane_width // D
    cos = jnp.tile(cos, (1, reps)).reshape(B, 1, lane_width).astype(dtype)
    sin = jnp.tile(sin, (1, reps)).reshape(B, 1, lane_width).astype(dtype)
    return cos, sin


def _vmem_budget_and_target():
    """Per-generation VMEM budget and per-operand tile-byte target."""
    try:
        vmem_cap = int(pltpu.get_tpu_info().vmem_capacity_bytes)
    except Exception:
        vmem_cap = 64 * 1024 * 1024          # conservative (v7x-sized) fallback
    budget = (vmem_cap // 4) * 3             # leave Mosaic scratch headroom
    # v5e/v6e (128 MiB VMEM): bigger tiles push toward the HBM-roofline plateau;
    # v7x (64 MiB): keep ~2 MiB tiles and rely on pipeline depth instead.
    target = (6 << 20) if budget > (48 << 20) else (2 << 20)
    return budget, target


def _pick_chunk(nc, sub, max_rows):
    """Largest divisor of nc that is a multiple of `sub` and <= max_rows;
    falls back to nc itself (full extent is always a legal block dim)."""
    if nc >= sub and nc % sub == 0:
        c = min(nc, max(sub, (max_rows // sub) * sub))
        while c > sub and nc % c:
            c -= sub
        if nc % c == 0:
            return c
    return nc


def rotary_embedding(q, k, base: float = 10000.0):
    """Pallas equivalent of RotaryEmbedding.forward(q, k)."""
    B, H, T, D = q.shape
    assert k.shape == q.shape
    assert D % 2 == 0
    # Literal module semantics: cos (T,1,1,D) broadcast against (B,H,T,D)
    # binds the cache's seq axis to batch -> B must equal T.
    assert B == T, "reference module's broadcast requires batch == seq_len"

    merged = H * T * D
    lw = _lane_width(D, merged)
    nc = merged // lw                        # sublane-chunk rows per batch

    # Free reshapes (contiguous trailing-dim split/merge, no transpose).
    q3 = q.reshape(B, nc, lw)
    k3 = k.reshape(B, nc, lw)

    table_dtype = q.dtype if q.dtype == jnp.bfloat16 else jnp.float32
    cos_t, sin_t = _build_tables(B, T, D, base, lw, table_dtype)

    itemsize = q.dtype.itemsize
    budget, target = _vmem_budget_and_target()
    sub = max(8, (8 * 4) // itemsize)        # sublane packing: 8 f32, 16 bf16

    ncb = _pick_chunk(nc, sub, max(1, target // (lw * itemsize)))
    bb = 1
    if ncb == nc:
        # Whole row fits in one block: widen the batch block for bigger DMAs,
        # but keep >= 4 grid steps so both v7x TensorCores get >= 2 pipelined
        # steps (input prefetch / output writeback overlap).
        min_depth = 4
        row_bytes = nc * lw * itemsize
        while (bb * 2 <= B and B % (bb * 2) == 0
               and (bb * 2) * row_bytes <= target
               and B // (bb * 2) >= min_depth):
            bb *= 2

    grid = (B // bb, nc // ncb)

    qk_spec = pl.BlockSpec((bb, ncb, lw), lambda i, j: (i, j, 0))
    tbl_spec = pl.BlockSpec((bb, 1, lw), lambda i, j: (i, 0, 0))

    q_out, k_out = pl.pallas_call(
        _rope_kernel,
        out_shape=(
            jax.ShapeDtypeStruct((B, nc, lw), q.dtype),
            jax.ShapeDtypeStruct((B, nc, lw), k.dtype),
        ),
        grid=grid,
        in_specs=[qk_spec, qk_spec, tbl_spec, tbl_spec],
        out_specs=(qk_spec, qk_spec),
        # No input_output_aliases: callers do not donate q/k, so aliasing would
        # only trigger XLA defensive copies (extra HBM traffic).
        compiler_params=pltpu.CompilerParams(
            dimension_semantics=("parallel", "parallel"),
            vmem_limit_bytes=budget,
        ),
    )(q3, k3, cos_t, sin_t)

    return q_out.reshape(B, H, T, D), k_out.reshape(B, H, T, D)


def rotary_reference(q, k, base: float = 10000.0):
    """Pure-JAX transliteration of the PyTorch forward (for verification)."""
    T, D = q.shape[-2], q.shape[-1]
    inv_freq = 1.0 / (base ** (jnp.arange(0, D, 2, dtype=jnp.float32) / D))
    t = jnp.arange(T, dtype=jnp.float32)
    freqs = jnp.einsum("i,j->ij", t, inv_freq)
    emb = jnp.concatenate((freqs, freqs), axis=-1)
    cos = jnp.cos(emb)[:, None, None, :]
    sin = jnp.sin(emb)[:, None, None, :]

    def apply(x):
        x_even = x[..., 0::2]
        x_odd = x[..., 1::2]
        x_rot = jnp.stack((-x_odd, x_even), axis=-1).reshape(x.shape)
        return x * cos + x_rot * sin

    return apply(q), apply(k)


if __name__ == "__main__":
    # B == T is required by the module's literal broadcasting of cos (T,1,1,D)
    # against q/k (B,H,T,D); we reproduce that convention here.
    B, H, T, D = 8, 4, 8, 32
    key = jax.random.PRNGKey(0)
    kq, kk = jax.random.split(key)
    q = jax.random.normal(kq, (B, H, T, D), dtype=jnp.float32)
    k = jax.random.normal(kk, (B, H, T, D), dtype=jnp.float32)

    q_out, k_out = jax.block_until_ready(rotary_embedding(q, k))

    q_ref, k_ref = rotary_reference(q, k)
    np.testing.assert_allclose(np.asarray(q_out), np.asarray(q_ref), rtol=1e-5, atol=1e-5)
    np.testing.assert_allclose(np.asarray(k_out), np.asarray(k_ref), rtol=1e-5, atol=1e-5)

    print("KERNEL_OK")
</pallas_src>

<mosaic_0001>
module attributes {stable_mosaic.version = 11 : i64} {
  func.func @_rope_kernel(%arg0: i32, %arg1: i32, %arg2: memref<2x8x128xf32, #tpu.memory_space<vmem>>, %arg3: memref<2x8x128xf32, #tpu.memory_space<vmem>>, %arg4: memref<2x1x128xf32, #tpu.memory_space<vmem>>, %arg5: memref<2x1x128xf32, #tpu.memory_space<vmem>>, %arg6: memref<2x8x128xf32, #tpu.memory_space<vmem>>, %arg7: memref<2x8x128xf32, #tpu.memory_space<vmem>>) attributes {dimension_semantics = [#tpu.dimension_semantics<parallel>, #tpu.dimension_semantics<parallel>], iteration_bounds = array<i64: 4, 1>, scalar_prefetch = 0 : i64, scratch_operands = 0 : i64, tpu.core_type = #tpu.core_type<tc>, window_params = [{transform_indices = @transform_0, window_bounds = array<i64: 2, 8, 128>}, {transform_indices = @transform_1, window_bounds = array<i64: 2, 8, 128>}, {transform_indices = @transform_2, window_bounds = array<i64: 2, 1, 128>}, {transform_indices = @transform_3, window_bounds = array<i64: 2, 1, 128>}, {transform_indices = @transform_4, window_bounds = array<i64: 2, 8, 128>}, {transform_indices = @transform_5, window_bounds = array<i64: 2, 8, 128>}]} {
    %c0 = arith.constant 0 : index
    %c0_0 = arith.constant 0 : index
    %c0_1 = arith.constant 0 : index
    %0 = vector.load %arg4[%c0, %c0_0, %c0_1] : memref<2x1x128xf32, #tpu.memory_space<vmem>>, vector<2x1x128xf32>
    %c0_2 = arith.constant 0 : index
    %c0_3 = arith.constant 0 : index
    %c0_4 = arith.constant 0 : index
    %1 = vector.load %arg5[%c0_2, %c0_3, %c0_4] : memref<2x1x128xf32, #tpu.memory_space<vmem>>, vector<2x1x128xf32>
    %2 = tpu.iota {dimensions = array<i32: 2>} : vector<1x1x128xi32>
    %c2_i32 = arith.constant 2 : i32
    %c0_i32 = arith.constant 0 : i32
    %3 = arith.cmpi eq, %c2_i32, %c0_i32 : i32
    %c1_i32 = arith.constant 1 : i32
    %4 = arith.select %3, %c1_i32, %c2_i32 : i32
    %5 = vector.broadcast %4 : i32 to vector<1x1x128xi32>
    %6 = arith.remsi %2, %5 : vector<1x1x128xi32>
    %c0_i32_5 = arith.constant 0 : i32
    %7 = vector.broadcast %c0_i32_5 : i32 to vector<1x1x128xi32>
    %8 = arith.cmpi ne, %6, %7 : vector<1x1x128xi32>
    %c0_i32_6 = arith.constant 0 : i32
    %9 = vector.broadcast %c0_i32_6 : i32 to vector<1x1x128xi32>
    %10 = arith.cmpi slt, %6, %9 : vector<1x1x128xi32>
    %c0_i32_7 = arith.constant 0 : i32
    %11 = arith.cmpi slt, %4, %c0_i32_7 : i32
    %12 = vector.broadcast %11 : i1 to vector<1x1x128xi1>
    %13 = vector.broadcast %12 : vector<1x1x128xi1> to vector<1x1x128xi1>
    %14 = arith.xori %10, %13 : vector<1x1x128xi1>
    %15 = arith.andi %14, %8 : vector<1x1x128xi1>
    %16 = vector.broadcast %4 : i32 to vector<1x1x128xi32>
    %17 = arith.addi %6, %16 : vector<1x1x128xi32>
    %18 = arith.select %15, %17, %6 : vector<1x1x128xi1>, vector<1x1x128xi32>
    %c0_i32_8 = arith.constant 0 : i32
    %19 = vector.broadcast %c0_i32_8 : i32 to vector<1x1x128xi32>
    %20 = arith.cmpi eq, %18, %19 : vector<1x1x128xi32>
    %c0_9 = arith.constant 0 : index
    %c0_10 = arith.constant 0 : index
    %c0_11 = arith.constant 0 : index
    %21 = vector.load %arg2[%c0_9, %c0_10, %c0_11] : memref<2x8x128xf32, #tpu.memory_space<vmem>>, vector<2x8x128xf32>
    %c127_i32 = arith.constant 127 : i32
    %22 = tpu.dynamic_rotate %21 by %c127_i32 dim 2 : vector<2x8x128xf32>, i32 -> vector<2x8x128xf32>
    %c1_i32_12 = arith.constant 1 : i32
    %23 = tpu.dynamic_rotate %21 by %c1_i32_12 dim 2 : vector<2x8x128xf32>, i32 -> vector<2x8x128xf32>
    %24 = vector.shape_cast %20 : vector<1x1x128xi1> to vector<1x1x128xi1>
    %25 = vector.broadcast %24 : vector<1x1x128xi1> to vector<2x8x128xi1>
    %26 = arith.select %25, %22, %23 : vector<2x8x128xi1>, vector<2x8x128xf32>
    %27 = vector.broadcast %0 : vector<2x1x128xf32> to vector<2x8x128xf32>
    %28 = arith.mulf %21, %27 : vector<2x8x128xf32>
    %29 = vector.broadcast %1 : vector<2x1x128xf32> to vector<2x8x128xf32>
    %30 = arith.mulf %26, %29 : vector<2x8x128xf32>
    %31 = arith.addf %28, %30 : vector<2x8x128xf32>
    %c0_13 = arith.constant 0 : index
    %c0_14 = arith.constant 0 : index
    %c0_15 = arith.constant 0 : index
    %32 = vector.load %arg6[%c0_13, %c0_14, %c0_15] : memref<2x8x128xf32, #tpu.memory_space<vmem>>, vector<2x8x128xf32>
    tpu.vector_store %arg6[%c0_13, %c0_14, %c0_15], %31 {strides = array<i32>} : memref<2x8x128xf32, #tpu.memory_space<vmem>>, vector<2x8x128xf32>,
    %c0_16 = arith.constant 0 : index
    %c0_17 = arith.constant 0 : index
    %c0_18 = arith.constant 0 : index
    %33 = vector.load %arg3[%c0_16, %c0_17, %c0_18] : memref<2x8x128xf32, #tpu.memory_space<vmem>>, vector<2x8x128xf32>
    %c127_i32_19 = arith.constant 127 : i32
    %34 = tpu.dynamic_rotate %33 by %c127_i32_19 dim 2 : vector<2x8x128xf32>, i32 -> vector<2x8x128xf32>
    %c1_i32_20 = arith.constant 1 : i32
    %35 = tpu.dynamic_rotate %33 by %c1_i32_20 dim 2 : vector<2x8x128xf32>, i32 -> vector<2x8x128xf32>
    %36 = vector.shape_cast %20 : vector<1x1x128xi1> to vector<1x1x128xi1>
    %37 = vector.broadcast %36 : vector<1x1x128xi1> to vector<2x8x128xi1>
    %38 = arith.select %37, %34, %35 : vector<2x8x128xi1>, vector<2x8x128xf32>
    %39 = vector.broadcast %0 : vector<2x1x128xf32> to vector<2x8x128xf32>
    %40 = arith.mulf %33, %39 : vector<2x8x128xf32>
    %41 = vector.broadcast %1 : vector<2x1x128xf32> to vector<2x8x128xf32>
    %42 = arith.mulf %38, %41 : vector<2x8x128xf32>
    %43 = arith.addf %40, %42 : vector<2x8x128xf32>
    %c0_21 = arith.constant 0 : index
    %c0_22 = arith.constant 0 : index
    %c0_23 = arith.constant 0 : index
    %44 = vector.load %arg7[%c0_21, %c0_22, %c0_23] : memref<2x8x128xf32, #tpu.memory_space<vmem>>, vector<2x8x128xf32>
    tpu.vector_store %arg7[%c0_21, %c0_22, %c0_23], %43 {strides = array<i32>} : memref<2x8x128xf32, #tpu.memory_space<vmem>>, vector<2x8x128xf32>,
    return
  }
  func.func @transform_0(%arg0: i32, %arg1: i32) -> (i32, i32, i32) {
    %c0_i32 = arith.constant 0 : i32
    %c0_i32_0 = arith.constant 0 : i32
    return %arg0, %arg1, %c0_i32 : i32, i32, i32
  }
  func.func @transform_1(%arg0: i32, %arg1: i32) -> (i32, i32, i32) {
    %c0_i32 = arith.constant 0 : i32
    %c0_i32_0 = arith.constant 0 : i32
    return %arg0, %arg1, %c0_i32 : i32, i32, i32
  }
  func.func @transform_2(%arg0: i32, %arg1: i32) -> (i32, i32, i32) {
    %c0_i32 = arith.constant 0 : i32
    %c0_i32_0 = arith.constant 0 : i32
    %c0_i32_1 = arith.constant 0 : i32
    return %arg0, %c0_i32, %c0_i32_0 : i32, i32, i32
  }
  func.func @transform_3(%arg0: i32, %arg1: i32) -> (i32, i32, i32) {
    %c0_i32 = arith.constant 0 : i32
    %c0_i32_0 = arith.constant 0 : i32
    %c0_i32_1 = arith.constant 0 : i32
    return %arg0, %c0_i32, %c0_i32_0 : i32, i32, i32
  }
  func.func @transform_4(%arg0: i32, %arg1: i32) -> (i32, i32, i32) {
    %c0_i32 = arith.constant 0 : i32
    %c0_i32_0 = arith.constant 0 : i32
    return %arg0, %arg1, %c0_i32 : i32, i32, i32
  }
  func.func @transform_5(%arg0: i32, %arg1: i32) -> (i32, i32, i32) {
    %c0_i32 = arith.constant 0 : i32
    %c0_i32_0 = arith.constant 0 : i32
    return %arg0, %arg1, %c0_i32 : i32, i32, i32
  }
}

</mosaic_0001>

<llo_original>
// kernel: tpu_custom_call.1
$region0: #{tpu_custom_call.1}
  #allocation0 [shape = 'u32[]', space=smem, size = 0x4, offset = 0x4, fixed_abs, tag = 'smem constant byte address 0x4 - core index']
  #allocation1 [shape = 'u32[144,128]{1,0:T(1,128)}', space=vmem, size = 0x12000, scoped, tag = 'internal scratch']
  %s0 = inlined_call_operand.hbm [shape: f32[8,8,128], index: 0, kind: input, shape index: {}]
  %s1 = inlined_call_operand.hbm [shape: f32[8,8,128], index: 1, kind: input, shape index: {}]
  %s2 = inlined_call_operand.hbm [shape: f32[8,1,128], index: 2, kind: input, shape index: {}]
  %s3 = inlined_call_operand.hbm [shape: f32[8,1,128], index: 3, kind: input, shape index: {}]
  %s4 = inlined_call_operand.hbm [shape: f32[8,8,128], index: 4, kind: output, shape index: {0}]
  %s5 = inlined_call_operand.hbm [shape: f32[8,8,128], index: 5, kind: output, shape index: {1}]
  %6 = xla_tuple %s4, %s5
  %s7 = sld [smem:[#allocation0]]
  $region73: #{tpu_custom_call.1} parent=0
    _
  %s9 = ssub.s32 1, %s7
  %s10 = scalar_select 0, %s9, %s7
  $region1: #{tpu_custom_call.1} parent=0
    #allocation2 [shape = 'u8[16384]{0}', space=vmem, size = 0x4000, scoped, tag = 'input window, operand 0']
    #allocation3 [shape = 's32[2]{0}', space=sflag, size = 0x8, scoped, tag = 'scoped memory for tpu_custom_call.1']
    #allocation4 [shape = 's32[2]{0}', space=sflag, size = 0x8, scoped, tag = 'scoped memory for tpu_custom_call.1']
    #allocation5 [shape = 'u8[16384]{0}', space=vmem, size = 0x4000, scoped, tag = 'input window, operand 1']
    #allocation6 [shape = 's32[2]{0}', space=sflag, size = 0x8, scoped, tag = 'scoped memory for tpu_custom_call.1']
    #allocation7 [shape = 'u8[2048]{0}', space=vmem, size = 0x800, scoped, tag = 'input window, operand 2']
    #allocation8 [shape = 'u8[2048]{0}', space=vmem, size = 0x800, scoped, tag = 'input window, operand 3']
    #allocation9 [shape = 's32[2]{0}', space=sflag, size = 0x8, scoped, tag = 'scoped memory for tpu_custom_call.1']
    #allocation10 [shape = 'u8[16384]{0}', space=vmem, size = 0x4000, scoped, tag = 'output window, operand 0']
    #allocation11 [shape = 'u8[16384]{0}', space=vmem, size = 0x4000, scoped, tag = 'output window, operand 1']
    #allocation12 [shape = 's32[2]{0}', space=sflag, size = 0x8, scoped, tag = 'scoped memory for tpu_custom_call.1']
    %11 = vsyncpa [#allocation3], 0
    %s12 = scalar_lea.sflag [#allocation3], 1
    %13 = vsyncpa %s12, 0
    %14 = vsyncpa [#allocation6], 0
    %s15 = scalar_lea.sflag [#allocation6], 1
    %16 = vsyncpa %s15, 0
    %17 = vsyncpa [#allocation9], 0
    %s18 = scalar_lea.sflag [#allocation9], 1
    %19 = vsyncpa %s18, 0
    %20 = vsyncpa [#allocation4], 0
    %s21 = scalar_lea.sflag [#allocation4], 1
    %22 = vsyncpa %s21, 0
    %23 = vsyncpa [#allocation12], 0
    %s24 = scalar_lea.sflag [#allocation12], 1
    %25 = vsyncpa %s24, 0
    loop: start=0, step=1, limit=6
    $region2: #{tpu_custom_call.1} parent=1 // loop_pre_header
      _
    $region3: #{tpu_custom_call.1} parent=1 // loop_header
      %s27 = sphi 0, %s31
      %p28 = scmp.ge.s32.totalorder %s27, 6
      %s34 = sphi 0, %s46
      %s35 = sphi 0, %s42
      %s36 = sphi 0, %s34
      %s37 = sphi 0, %s35
      %s38 = sphi 0, %s36
      %s39 = sphi 0, %s37
      %s51 = sphi 0, %s53
      %s54 = sphi 0, %s51
      %s55 = sphi 0, %s54
      %s71 = sphi 0, %s55
      %s79 = sphi 0, %s81
      %s82 = sphi 0, %s79
      %s83 = sphi 0, %s82
      %s99 = sphi 0, %s83
      %s105 = sphi 0, %s107
      %s108 = sphi 0, %s105
      %s109 = sphi 0, %s108
      %s125 = sphi 0, %s109
      %s131 = sphi 0, %s133
      %s134 = sphi 0, %s131
      %s135 = sphi 0, %s134
      %s151 = sphi 0, %s135
      %s159 = sphi 0, %s161
      %s162 = sphi 0, %s159
      %s163 = sphi 0, %s162
      %s179 = sphi 0, %s163
      %s187 = sphi 0, %s189
      %s190 = sphi 0, %s187
      %s191 = sphi 0, %s190
      %s207 = sphi 0, %s191
    $region4: #{tpu_custom_call.1} parent=1 // loop_header_branch
      %30 = sbr.rel (%p28) target = $region8
    $region5: #{tpu_custom_call.1} parent=1 // loop_body
      %s32 = ssub.s32 %s27, 1
      %s33 = ssub.s32 %s27, 2
      %s40 = sadd.s32 1, %s35
      %p41 = scmp.ge.s32.totalorder %s40, 1
      %s42 = scalar_select %p41, 0, %s40
      %s43 = sadd.s32 1, %s34
      %s44 = scalar_select %p41, %s43, %s34
      %p45 = scmp.ge.s32.totalorder %s44, 4
      %s46 = scalar_select %p45, 0, %s44
      %s47 = ssub.s32 %s34, %s46
      %s48 = ssub.s32 %s35, %s42
      %s49 = sor.u32 %s47, %s48
      %p50 = scmp.eq.s32.totalorder %s49, 0
      %s52 = sadd.s32 %s51, 1
      %s53 = scalar_select %p50, %s51, %s52
      %p56 = pneg %p50
      %p57 = scmp.eq.s32.totalorder %s27, 3
      %p58 = por %p56, %p57
      %p59 = scmp.ne.s32.totalorder %s51, %s54
      %p60 = scmp.eq.s32.totalorder %s27, 0
      %p61 = por %p59, %p60
      %p62 = scmp.ne.s32.totalorder %s51, %s54
      %p63 = scmp.eq.s32.totalorder %s32, 3
      %p64 = por %p62, %p63
      %p65 = scmp.ne.s32.totalorder %s54, %s55
      %p66 = scmp.eq.s32.totalorder %s32, 0
      %p67 = por %p65, %p66
      %p68 = scmp.ne.s32.totalorder %s54, %s55
      %p69 = scmp.eq.s32.totalorder %s33, 3
      %p70 = por %p68, %p69
      %p72 = scmp.ne.s32.totalorder %s55, %s71
      %p73 = scmp.eq.s32.totalorder %s33, 0
      %p74 = por %p72, %p73
      %s75 = ssub.s32 %s34, %s46
      %s76 = ssub.s32 %s35, %s42
      %s77 = sor.u32 %s75, %s76
      %p78 = scmp.eq.s32.totalorder %s77, 0
      %s80 = sadd.s32 %s79, 1
      %s81 = scalar_select %p78, %s79, %s80
      %p84 = pneg %p78
      %p85 = scmp.eq.s32.totalorder %s27, 3
      %p86 = por %p84, %p85
      %p87 = scmp.ne.s32.totalorder %s79, %s82
      %p88 = scmp.eq.s32.totalorder %s27, 0
      %p89 = por %p87, %p88
      %p90 = scmp.ne.s32.totalorder %s79, %s82
      %p91 = scmp.eq.s32.totalorder %s32, 3
      %p92 = por %p90, %p91
      %p93 = scmp.ne.s32.totalorder %s82, %s83
      %p94 = scmp.eq.s32.totalorder %s32, 0
      %p95 = por %p93, %p94
      %p96 = scmp.ne.s32.totalorder %s82, %s83
      %p97 = scmp.eq.s32.totalorder %s33, 3
      %p98 = por %p96, %p97
      %p100 = scmp.ne.s32.totalorder %s83, %s99
      %p101 = scmp.eq.s32.totalorder %s33, 0
      %p102 = por %p100, %p101
      %s103 = ssub.s32 %s34, %s46
      %p104 = scmp.eq.s32.totalorder %s103, 0
      %s106 = sadd.s32 %s105, 1
      %s107 = scalar_select %p104, %s105, %s106
      %p110 = pneg %p104
      %p111 = scmp.eq.s32.totalorder %s27, 3
      %p112 = por %p110, %p111
      %p113 = scmp.ne.s32.totalorder %s105, %s108
      %p114 = scmp.eq.s32.totalorder %s27, 0
      %p115 = por %p113, %p114
      %p116 = scmp.ne.s32.totalorder %s105, %s108
      %p117 = scmp.eq.s32.totalorder %s32, 3
      %p118 = por %p116, %p117
      %p119 = scmp.ne.s32.totalorder %s108, %s109
      %p120 = scmp.eq.s32.totalorder %s32, 0
      %p121 = por %p119, %p120
      %p122 = scmp.ne.s32.totalorder %s108, %s109
      %p123 = scmp.eq.s32.totalorder %s33, 3
      %p124 = por %p122, %p123
      %p126 = scmp.ne.s32.totalorder %s109, %s125
      %p127 = scmp.eq.s32.totalorder %s33, 0
      %p128 = por %p126, %p127
      %s129 = ssub.s32 %s34, %s46
      %p130 = scmp.eq.s32.totalorder %s129, 0
      %s132 = sadd.s32 %s131, 1
      %s133 = scalar_select %p130, %s131, %s132
      %p136 = pneg %p130
      %p137 = scmp.eq.s32.totalorder %s27, 3
      %p138 = por %p136, %p137
      %p139 = scmp.ne.s32.totalorder %s131, %s134
      %p140 = scmp.eq.s32.totalorder %s27, 0
      %p141 = por %p139, %p140
      %p142 = scmp.ne.s32.totalorder %s131, %s134
      %p143 = scmp.eq.s32.totalorder %s32, 3
      %p144 = por %p142, %p143
      %p145 = scmp.ne.s32.totalorder %s134, %s135
      %p146 = scmp.eq.s32.totalorder %s32, 0
      %p147 = por %p145, %p146
      %p148 = scmp.ne.s32.totalorder %s134, %s135
      %p149 = scmp.eq.s32.totalorder %s33, 3
      %p150 = por %p148, %p149
      %p152 = scmp.ne.s32.totalorder %s135, %s151
      %p153 = scmp.eq.s32.totalorder %s33, 0
      %p154 = por %p152, %p153
      %s155 = ssub.s32 %s34, %s46
      %s156 = ssub.s32 %s35, %s42
      %s157 = sor.u32 %s155, %s156
      %p158 = scmp.eq.s32.totalorder %s157, 0
      %s160 = sadd.s32 %s159, 1
      %s161 = scalar_select %p158, %s159, %s160
      %p164 = pneg %p158
      %p165 = scmp.eq.s32.totalorder %s27, 3
      %p166 = por %p164, %p165
      %p167 = scmp.ne.s32.totalorder %s159, %s162
      %p168 = scmp.eq.s32.totalorder %s27, 0
      %p169 = por %p167, %p168
      %p170 = scmp.ne.s32.totalorder %s159, %s162
      %p171 = scmp.eq.s32.totalorder %s32, 3
      %p172 = por %p170, %p171
      %p173 = scmp.ne.s32.totalorder %s162, %s163
      %p174 = scmp.eq.s32.totalorder %s32, 0
      %p175 = por %p173, %p174
      %p176 = scmp.ne.s32.totalorder %s162, %s163
      %p177 = scmp.eq.s32.totalorder %s33, 3
      %p178 = por %p176, %p177
      %p180 = scmp.ne.s32.totalorder %s163, %s179
      %p181 = scmp.eq.s32.totalorder %s33, 0
      %p182 = por %p180, %p181
      %s183 = ssub.s32 %s34, %s46
      %s184 = ssub.s32 %s35, %s42
      %s185 = sor.u32 %s183, %s184
      %p186 = scmp.eq.s32.totalorder %s185, 0
      %s188 = sadd.s32 %s187, 1
      %s189 = scalar_select %p186, %s187, %s188
      %p192 = pneg %p186
      %p193 = scmp.eq.s32.totalorder %s27, 3
      %p194 = por %p192, %p193
      %p195 = scmp.ne.s32.totalorder %s187, %s190
      %p196 = scmp.eq.s32.totalorder %s27, 0
      %p197 = por %p195, %p196
      %p198 = scmp.ne.s32.totalorder %s187, %s190
      %p199 = scmp.eq.s32.totalorder %s32, 3
      %p200 = por %p198, %p199
      %p201 = scmp.ne.s32.totalorder %s190, %s191
      %p202 = scmp.eq.s32.totalorder %s32, 0
      %p203 = por %p201, %p202
      %p204 = scmp.ne.s32.totalorder %s190, %s191
      %p205 = scmp.eq.s32.totalorder %s33, 3
      %p206 = por %p204, %p205
      %p208 = scmp.ne.s32.totalorder %s191, %s207
      %p209 = scmp.eq.s32.totalorder %s33, 0
      %p210 = por %p208, %p209
      %p211 = scmp.le.s32.totalorder 1, %s27
      %p212 = scmp.lt.s32.totalorder %s27, 5
      %p213 = pnand %p211, %p212
      %p214 = pneg %p213
      // Predicated region
      $region9: #{tpu_custom_call.1} parent=5 // pred_check
        _
      $region10: #{tpu_custom_call.1} parent=5 // pred_check_branch
        %216 = sbr.rel (%p213) target = $region12
      $region11: #{tpu_custom_call.1} parent=5 // pred_region
        %s217 = ssub.s32 %s27, 1
      $region12: #{tpu_custom_call.1} parent=5 // pred_fallthru
        _
      %p218 = scmp.lt.s32.totalorder %s27, 4
      // Predicated region
      $region13: #{tpu_custom_call.1} parent=5 // pred_check
        %p219 = pneg %p218
      $region14: #{tpu_custom_call.1} parent=5 // pred_check_branch
        %221 = sbr.rel (%p219) target = $region16
      $region15: #{tpu_custom_call.1} parent=5 // pred_region
        // Predicated region
        $region17: #{tpu_custom_call.1} parent=15 // pred_check
          %p222 = pneg %p61
        $region18: #{tpu_custom_call.1} parent=15 // pred_check_branch
          %224 = sbr.rel (%p222) target = $region20
        $region19: #{tpu_custom_call.1} parent=15 // pred_region
          %s225 = sand.u32 %s51, 1
          %s226 = scalar_lea.sflag [#allocation3], %s225
          %s227 = sand.u32 %s51, 1
          %s228 = smul.addr %s227, 16
          %s229 = scalar_lea.vmem [#allocation2], %s228
          %s230 = smul.u32 2, %s34
          %s232 = ssub.s32 256, 256
          %233 = vsyncadd %s226, %s232
          %s234 = sadd.s32 %s35, %s230
          %s235 = smul.addr %s234, 128
          %s236 = scalar_lea.hbm %s0, %s235
          %s237 = sshll.u32 %s229, 4
          %s238 = int_to_ptr.vmem [resolvable:$true] %s237
          %243 = dma.hbm_to_vmem [thread:$0]  %s236, 256, %s238, %s226, 128, 128, 8
        $region20: #{tpu_custom_call.1} parent=15 // pred_fallthru
          _
        // Predicated region
        $region21: #{tpu_custom_call.1} parent=15 // pred_check
          %p244 = pneg %p89
        $region22: #{tpu_custom_call.1} parent=15 // pred_check_branch
          %246 = sbr.rel (%p244) target = $region24
        $region23: #{tpu_custom_call.1} parent=15 // pred_region
          %s247 = sand.u32 %s27, 1
          %s248 = scalar_lea.sflag [#allocation6], %s247
          %s249 = sand.u32 %s79, 1
          %s250 = smul.addr %s249, 16
          %s251 = scalar_lea.vmem [#allocation5], %s250
          %s252 = smul.u32 2, %s34
          %s254 = ssub.s32 256, 256
          %255 = vsyncadd %s248, %s254
          %s256 = sadd.s32 %s35, %s252
          %s257 = smul.addr %s256, 128
          %s258 = scalar_lea.hbm %s1, %s257
          %s259 = sshll.u32 %s251, 4
          %s260 = int_to_ptr.vmem [resolvable:$true] %s259
          %265 = dma.hbm_to_vmem [thread:$0]  %s258, 256, %s260, %s248, 128, 128, 8
        $region24: #{tpu_custom_call.1} parent=15 // pred_fallthru
          _
        // Predicated region
        $region25: #{tpu_custom_call.1} parent=15 // pred_check
          %p266 = pneg %p115
        $region26: #{tpu_custom_call.1} parent=15 // pred_check_branch
          %268 = sbr.rel (%p266) target = $region28
        $region27: #{tpu_custom_call.1} parent=15 // pred_region
          %s269 = sand.u32 %s27, 1
          %s270 = scalar_lea.sflag [#allocation6], %s269
          %s271 = sand.u32 %s105, 1
          %s272 = smul.addr %s271, 2
          %s273 = scalar_lea.vmem [#allocation7], %s272
          %s274 = smul.u32 2, %s34
          %s276 = ssub.s32 32, 32
          %277 = vsyncadd %s270, %s276
          %s278 = smul.addr %s274, 16
          %s279 = scalar_lea.hbm %s2, %s278
          %s280 = sshll.u32 %s273, 4
          %s281 = int_to_ptr.vmem [resolvable:$true] %s280
          %286 = dma.hbm_to_vmem [thread:$0]  %s279, 32, %s281, %s270, 16, 16, 1
        $region28: #{tpu_custom_call.1} parent=15 // pred_fallthru
          _
        // Predicated region
        $region29: #{tpu_custom_call.1} parent=15 // pred_check
          %p287 = pneg %p141
        $region30: #{tpu_custom_call.1} parent=15 // pred_check_branch
          %289 = sbr.rel (%p287) target = $region32
        $region31: #{tpu_custom_call.1} parent=15 // pred_region
          %s290 = sand.u32 %s131, 1
          %s291 = scalar_lea.sflag [#allocation9], %s290
          %s292 = sand.u32 %s131, 1
          %s293 = smul.addr %s292, 2
          %s294 = scalar_lea.vmem [#allocation8], %s293
          %s295 = smul.u32 2, %s34
          %s297 = ssub.s32 32, 32
          %298 = vsyncadd %s291, %s297
          %s299 = smul.addr %s295, 16
          %s300 = scalar_lea.hbm %s3, %s299
          %s301 = sshll.u32 %s294, 4
          %s302 = int_to_ptr.vmem [resolvable:$true] %s301
          %307 = dma.hbm_to_vmem [thread:$0]  %s300, 32, %s302, %s291, 16, 16, 1
        $region32: #{tpu_custom_call.1} parent=15 // pred_fallthru
          _
      $region16: #{tpu_custom_call.1} parent=5 // pred_fallthru
        _
      %p308 = scmp.le.s32.totalorder 1, %s27
      %p309 = scmp.lt.s32.totalorder %s27, 5
      %p310 = pnand %p308, %p309
      %p311 = pneg %p310
      // Predicated region
      $region33: #{tpu_custom_call.1} parent=5 // pred_check
        _
      $region34: #{tpu_custom_call.1} parent=5 // pred_check_branch
        %313 = sbr.rel (%p310) target = $region36
      $region35: #{tpu_custom_call.1} parent=5 // pred_region
        %s314 = ssub.s32 %s27, 1
        %s315 = sand.u32 %s54, 1
        %s316 = scalar_lea.sflag [#allocation3], %s315
        %s317 = sand.u32 %s54, 1
        %s318 = smul.addr %s317, 16
        %s319 = scalar_lea.vmem [#allocation2], %s318
        // Predicated region
        $region37: #{tpu_custom_call.1} parent=35 // pred_check
          %p320 = pneg %p67
        $region38: #{tpu_custom_call.1} parent=35 // pred_check_branch
          %322 = sbr.rel (%p320) target = $region40
        $region39: #{tpu_custom_call.1} parent=35 // pred_region
          %323 = dma.done %s316, 256
        $region40: #{tpu_custom_call.1} parent=35 // pred_fallthru
          _
        %s324 = sand.u32 %s32, 1
        %s325 = scalar_lea.sflag [#allocation6], %s324
        %s326 = sand.u32 %s82, 1
        %s327 = smul.addr %s326, 16
        %s328 = scalar_lea.vmem [#allocation5], %s327
        // Predicated region
        $region41: #{tpu_custom_call.1} parent=35 // pred_check
          %p329 = pneg %p95
        $region42: #{tpu_custom_call.1} parent=35 // pred_check_branch
          %331 = sbr.rel (%p329) target = $region44
        $region43: #{tpu_custom_call.1} parent=35 // pred_region
          %332 = dma.done %s325, 256
        $region44: #{tpu_custom_call.1} parent=35 // pred_fallthru
          _
        %s333 = sand.u32 %s32, 1
        %s334 = scalar_lea.sflag [#allocation6], %s333
        %s335 = sand.u32 %s108, 1
        %s336 = smul.addr %s335, 2
        %s337 = scalar_lea.vmem [#allocation7], %s336
        // Predicated region
        $region45: #{tpu_custom_call.1} parent=35 // pred_check
          %p338 = pneg %p121
        $region46: #{tpu_custom_call.1} parent=35 // pred_check_branch
          %340 = sbr.rel (%p338) target = $region48
        $region47: #{tpu_custom_call.1} parent=35 // pred_region
          %341 = dma.done %s334, 32
        $region48: #{tpu_custom_call.1} parent=35 // pred_fallthru
          _
        %s342 = sand.u32 %s134, 1
        %s343 = scalar_lea.sflag [#allocation9], %s342
        %s344 = sand.u32 %s134, 1
        %s345 = smul.addr %s344, 2
        %s346 = scalar_lea.vmem [#allocation8], %s345
        // Predicated region
        $region49: #{tpu_custom_call.1} parent=35 // pred_check
          %p347 = pneg %p147
        $region50: #{tpu_custom_call.1} parent=35 // pred_check_branch
          %349 = sbr.rel (%p347) target = $region52
        $region51: #{tpu_custom_call.1} parent=35 // pred_region
          %350 = dma.done %s343, 32
        $region52: #{tpu_custom_call.1} parent=35 // pred_fallthru
          _
        %s351 = sand.u32 %s54, 1
        %s352 = scalar_lea.sflag [#allocation3], %s351
        %s353 = sand.u32 %s54, 1
        %s354 = smul.addr %s353, 16
        %s355 = scalar_lea.vmem [#allocation2], %s354
        %p356 = pneg %p67
        %p357 = pneg %p64
        %s358 = sand.u32 %s32, 1
        %s359 = scalar_lea.sflag [#allocation6], %s358
        %s360 = sand.u32 %s82, 1
        %s361 = smul.addr %s360, 16
        %s362 = scalar_lea.vmem [#allocation5], %s361
        %p363 = pneg %p95
        %p364 = pneg %p92
        %s365 = sand.u32 %s32, 1
        %s366 = scalar_lea.sflag [#allocation6], %s365
        %s367 = sand.u32 %s108, 1
        %s368 = smul.addr %s367, 2
        %s369 = scalar_lea.vmem [#allocation7], %s368
        %p370 = pneg %p121
        %p371 = pneg %p118
        %s372 = sand.u32 %s134, 1
        %s373 = scalar_lea.sflag [#allocation9], %s372
        %s374 = sand.u32 %s134, 1
        %s375 = smul.addr %s374, 2
        %s376 = scalar_lea.vmem [#allocation8], %s375
        %p377 = pneg %p147
        %p378 = pneg %p144
        %p379 = pneg %p175
        %p380 = pneg %p172
        %s381 = sand.u32 %s162, 1
        %s382 = scalar_lea.sflag [#allocation4], %s381
        %s383 = sand.u32 %s162, 1
        %s384 = smul.addr %s383, 16
        %s385 = scalar_lea.vmem [#allocation10], %s384
        %p386 = pneg %p203
        %p387 = pneg %p200
        %s388 = sand.u32 %s190, 1
        %s389 = scalar_lea.sflag [#allocation12], %s388
        %s390 = sand.u32 %s190, 1
        %s391 = smul.addr %s390, 16
        %s392 = scalar_lea.vmem [#allocation11], %s391
        %s393 = smul.u32 2, %s36
        %s394 = smul.u32 2, %s36
        %s395 = smul.u32 2, %s36
        %s396 = smul.u32 2, %s36
        %s397 = smul.u32 2, %s36
        %s398 = smul.u32 2, %s36
        %v399 = vld [vmem:[%s337] sm:$0x1]
        %v400 = vld [vmem:[%s337 + $0x1] sm:$0x1]
        %v401 = vld [vmem:[%s346] sm:$0x1]
        %v402 = vld [vmem:[%s346 + $0x1] sm:$0x1]
        %v403 = vlaneseq
        %v404 = vand.u32 %v403, 127
        %vm405 = vcmp.lt.s32.totalorder %v404, 0
        %v406 = vsub.s32 0, %v404
        %v407 = vsel %vm405, %v406, %v404
        %v408 = vshrl.u32 %v407, 1
        %v409 = vand.u32 %v407, 1
        %v410 = vsub.s32 0, %v409
        %v411 = vsel %vm405, %v410, %v409
        %vm412 = vcmp.ne.s32.totalorder %v411, 0
        %vm413 = vcmp.lt.s32.totalorder %v411, 0
        %vm414 = vmand %vm413, %vm412
        %v415 = vadd.s32 %v411, 2
        %v416 = vsel %vm414, %v415, %v411
        %vm417 = vcmp.eq.s32.totalorder %v416, 0
        %v418 = vld [vmem:[%s319] sm:$0xff]
        %v419 = vld [vmem:[%s319 + $0x8] sm:$0xff]
        %420 = vrot.lane.b32.xlu0 %v418, 127
        %v421 = vpop.permute.xlu0 %420
        %422 = vrot.lane.b32.xlu0 %v419, 127
        %v423 = vpop.permute.xlu0 %422
        %424 = vrot.lane.b32.xlu0 %v418, 1
        %v425 = vpop.permute.xlu0 %424
        %426 = vrot.lane.b32.xlu0 %v419, 1
        %v427 = vpop.permute.xlu0 %426
        %v428 = vsel %vm417, 1, 0
        %vm429 = vcmp.eq.s32.totalorder %v428, 1
        %v430 = vsel %vm429, %v421, %v425
        %v431 = vsel %vm429, %v423, %v427
        %v434 = vlaneseq
        %v435 = vshrl.u32 %v434, 7
        %v436 = vsub.s32 0, %v435
        %v437 = vrot.slane %v399, %v436
        %v438 = vlaneseq
        %v439 = vshrl.u32 %v438, 7
        %v440 = vsub.s32 0, %v439
        %v441 = vrot.slane %v400, %v440
        %v444 = vmul.f32 %v418, %v437
        %v445 = vmul.f32 %v419, %v441
        %v448 = vlaneseq
        %v449 = vshrl.u32 %v448, 7
        %v450 = vsub.s32 0, %v449
        %v451 = vrot.slane %v401, %v450
        %v452 = vlaneseq
        %v453 = vshrl.u32 %v452, 7
        %v454 = vsub.s32 0, %v453
        %v455 = vrot.slane %v402, %v454
        %v458 = vmul.f32 %v430, %v451
        %v459 = vmul.f32 %v431, %v455
        %v460 = vadd.f32 %v444, %v458
        %v461 = vadd.f32 %v445, %v459
        %462 = vst [vmem:[%s385] sm:$0xff] %v460
        %463 = vst [vmem:[%s385 + $0x8] sm:$0xff] %v461
        %v464 = vld [vmem:[%s328] sm:$0xff]
        %v465 = vld [vmem:[%s328 + $0x8] sm:$0xff]
        %466 = vrot.lane.b32.xlu0 %v464, 127
        %v467 = vpop.permute.xlu0 %466
        %468 = vrot.lane.b32.xlu0 %v465, 127
        %v469 = vpop.permute.xlu0 %468
        %470 = vrot.lane.b32.xlu0 %v464, 1
        %v471 = vpop.permute.xlu0 %470
        %472 = vrot.lane.b32.xlu0 %v465, 1
        %v473 = vpop.permute.xlu0 %472
        %v474 = vsel %vm429, %v467, %v471
        %v475 = vsel %vm429, %v469, %v473
        %v476 = vmul.f32 %v464, %v437
        %v477 = vmul.f32 %v465, %v441
        %v478 = vmul.f32 %v474, %v451
        %v479 = vmul.f32 %v475, %v455
        %v480 = vadd.f32 %v476, %v478
        %v481 = vadd.f32 %v477, %v479
        %482 = vst [vmem:[%s392] sm:$0xff] %v480
        %483 = vst [vmem:[%s392 + $0x8] sm:$0xff] %v481
        %s484 = sand.u32 %s162, 1
        %s485 = scalar_lea.sflag [#allocation4], %s484
        %s486 = sand.u32 %s162, 1
        %s487 = smul.addr %s486, 16
        %s488 = scalar_lea.vmem [#allocation10], %s487
        %s489 = sand.u32 %s190, 1
        %s490 = scalar_lea.sflag [#allocation12], %s489
        %s491 = sand.u32 %s190, 1
        %s492 = smul.addr %s491, 16
        %s493 = scalar_lea.vmem [#allocation11], %s492
        // Predicated region
        $region53: #{tpu_custom_call.1} parent=35 // pred_check
          %p494 = pneg %p172
        $region54: #{tpu_custom_call.1} parent=35 // pred_check_branch
          %496 = sbr.rel (%p494) target = $region56
        $region55: #{tpu_custom_call.1} parent=35 // pred_region
          %s497 = smul.u32 2, %s36
          %s499 = ssub.s32 256, 256
          %500 = vsyncadd %s485, %s499
          %s501 = sadd.s32 %s37, %s497
          %s502 = smul.addr %s501, 128
          %s503 = scalar_lea.hbm %s4, %s502
          %s504 = sshll.u32 %s488, 4
          %s505 = int_to_ptr.vmem [resolvable:$true] %s504
          %510 = dma.vmem_to_hbm [thread:$0]  %s505, 256, %s503, %s485, 128, 128, 8
        $region56: #{tpu_custom_call.1} parent=35 // pred_fallthru
          _
        // Predicated region
        $region57: #{tpu_custom_call.1} parent=35 // pred_check
          %p511 = pneg %p200
        $region58: #{tpu_custom_call.1} parent=35 // pred_check_branch
          %513 = sbr.rel (%p511) target = $region60
        $region59: #{tpu_custom_call.1} parent=35 // pred_region
          %s514 = smul.u32 2, %s36
          %s516 = ssub.s32 256, 256
          %517 = vsyncadd %s490, %s516
          %s518 = sadd.s32 %s37, %s514
          %s519 = smul.addr %s518, 128
          %s520 = scalar_lea.hbm %s5, %s519
          %s521 = sshll.u32 %s493, 4
          %s522 = int_to_ptr.vmem [resolvable:$true] %s521
          %527 = dma.vmem_to_hbm [thread:$0]  %s522, 256, %s520, %s490, 128, 128, 8
        $region60: #{tpu_custom_call.1} parent=35 // pred_fallthru
          _
      $region36: #{tpu_custom_call.1} parent=5 // pred_fallthru
        _
      %p528 = scmp.le.s32.totalorder 2, %s27
      // Predicated region
      $region61: #{tpu_custom_call.1} parent=5 // pred_check
        %p529 = pneg %p528
      $region62: #{tpu_custom_call.1} parent=5 // pred_check_branch
        %531 = sbr.rel (%p529) target = $region64
      $region63: #{tpu_custom_call.1} parent=5 // pred_region
        %s532 = ssub.s32 %s27, 2
        // Predicated region
        $region65: #{tpu_custom_call.1} parent=63 // pred_check
          %p533 = pneg %p178
        $region66: #{tpu_custom_call.1} parent=63 // pred_check_branch
          %535 = sbr.rel (%p533) target = $region68
        $region67: #{tpu_custom_call.1} parent=63 // pred_region
          %s536 = sand.u32 %s163, 1
          %s537 = scalar_lea.sflag [#allocation4], %s536
          %s538 = sand.u32 %s163, 1
          %s539 = smul.addr %s538, 16
          %s540 = scalar_lea.vmem [#allocation10], %s539
          %541 = dma.done %s537, 256
        $region68: #{tpu_custom_call.1} parent=63 // pred_fallthru
          _
        // Predicated region
        $region69: #{tpu_custom_call.1} parent=63 // pred_check
          %p542 = pneg %p206
        $region70: #{tpu_custom_call.1} parent=63 // pred_check_branch
          %544 = sbr.rel (%p542) target = $region72
        $region71: #{tpu_custom_call.1} parent=63 // pred_region
          %s545 = sand.u32 %s191, 1
          %s546 = scalar_lea.sflag [#allocation12], %s545
          %s547 = sand.u32 %s191, 1
          %s548 = smul.addr %s547, 16
          %s549 = scalar_lea.vmem [#allocation11], %s548
          %550 = dma.done %s546, 256
        $region72: #{tpu_custom_call.1} parent=63 // pred_fallthru
          _
      $region64: #{tpu_custom_call.1} parent=5 // pred_fallthru
        _
    $region6: #{tpu_custom_call.1} parent=1 // loop_footer
      %s31 = sadd.s32 1, %s27
    $region7: #{tpu_custom_call.1} parent=1 // loop_footer_branch
      %26 = sbr.rel target = $region3
    $region8: #{tpu_custom_call.1} parent=1 // loop_exit
      _
    %551 = vsyncpa [#allocation3], 1
    %s552 = scalar_lea.sflag [#allocation3], 1
    %553 = vsyncpa %s552, 1
    %554 = vsyncpa [#allocation6], 1
    %s555 = scalar_lea.sflag [#allocation6], 1
    %556 = vsyncpa %s555, 1
    %557 = vsyncpa [#allocation9], 1
    %s558 = scalar_lea.sflag [#allocation9], 1
    %559 = vsyncpa %s558, 1
    %560 = vsyncpa [#allocation4], 1
    %s561 = scalar_lea.sflag [#allocation4], 1
    %562 = vsyncpa %s561, 1
    %563 = vsyncpa [#allocation12], 1
    %s564 = scalar_lea.sflag [#allocation12], 1
    %565 = vsyncpa %s564, 1

</llo_original>
